<compile_context>
chip_gen: v5e
topology: v5e:2x2
jax: 0.10.0
libtpu: 0.0.40
codegen_flags: <defaults>
</compile_context>

<pallas_src>
import functools

import jax
import jax.numpy as jnp
from jax.experimental import pallas as pl
from jax.experimental.pallas import tpu as pltpu

IN_FEATURES = 3 * 32 * 32   # 3072
HIDDEN = 16
OUT_FEATURES = 10
OUT_PAD = 128               # lane-dense kernel output width (sliced to 10 in wrapper)


def _round_up(n, m):
    return ((n + m - 1) // m) * m


def mlp_kernel(x_ref, w1_ref, b1_ref, w2_ref, b2_ref, o_ref):
    # fc1 on the MXU with f32 accumulation; bias + ReLU on the VPU.
    # (Kernel is DMA-bound on x, so matmul precision/passes are hidden.)
    h = jnp.dot(x_ref[...], w1_ref[...], preferred_element_type=jnp.float32)
    h = jnp.maximum(h + b1_ref[...], 0.0)
    # fc2 against the 128-lane zero-padded weight -> dense (tm, 128) store.
    y = jnp.dot(h, w2_ref[...], preferred_element_type=jnp.float32)
    o_ref[...] = (y + b2_ref[...]).astype(o_ref.dtype)


@functools.partial(jax.jit, static_argnames=("tm",))
def dnn3_forward(x_nchw, w1, b1, w2, b2, *, tm=1024):
    """x_nchw: (B, 3, 32, 32) float32. Returns (B, 10) float32."""
    B = x_nchw.shape[0]
    # Same flattening as torch.flatten(x, 1) (row-major over C, H, W).
    x_flat = x_nchw.reshape(B, IN_FEATURES)

    # Batch tile: multiple of 8 (f32 sublane packing), clamped for tiny
    # batches. The grid uses cdiv; the ragged final block is handled by
    # Pallas (no materialized padding of x).
    tm = max(8, min(tm, _round_up(B, 8)))
    grid = (pl.cdiv(B, tm),)

    b1_2d = b1.reshape(1, HIDDEN).astype(jnp.float32)
    # Zero-pad fc2 to 128 output lanes -> unmasked, lane-dense output stores
    # and a contiguous output writeback DMA.
    w2_p = jnp.zeros((HIDDEN, OUT_PAD), jnp.float32).at[:, :OUT_FEATURES].set(w2)
    b2_p = jnp.zeros((1, OUT_PAD), jnp.float32).at[:, :OUT_FEATURES].set(
        b2.reshape(1, OUT_FEATURES))

    cost = pl.CostEstimate(
        flops=2 * B * IN_FEATURES * HIDDEN + 2 * B * HIDDEN * OUT_PAD,
        transcendentals=0,
        bytes_accessed=(B * IN_FEATURES * 4            # x stream (dominant)
                        + IN_FEATURES * HIDDEN * 4     # w1 (resident)
                        + HIDDEN * 4                   # b1
                        + (HIDDEN + 1) * OUT_PAD * 4   # w2 / b2 (padded)
                        + B * OUT_PAD * 4),            # output
    )

    out_padded = pl.pallas_call(
        mlp_kernel,
        out_shape=jax.ShapeDtypeStruct((B, OUT_PAD), jnp.float32),
        grid=grid,
        in_specs=[
            pl.BlockSpec((tm, IN_FEATURES), lambda i: (i, 0)),       # x: streamed per tile
            pl.BlockSpec((IN_FEATURES, HIDDEN), lambda i: (0, 0)),   # w1: resident
            pl.BlockSpec((1, HIDDEN), lambda i: (0, 0)),             # b1: resident
            pl.BlockSpec((HIDDEN, OUT_PAD), lambda i: (0, 0)),       # w2 (padded): resident
            pl.BlockSpec((1, OUT_PAD), lambda i: (0, 0)),            # b2 (padded): resident
        ],
        out_specs=pl.BlockSpec((tm, OUT_PAD), lambda i: (i, 0)),
        compiler_params=pltpu.CompilerParams(
            # Batch axis is independent -> shard across v7x's two TensorCores
            # (harmless on single-TC v5e/v6e).
            dimension_semantics=("parallel",),
            # tm=1024 f32 needs ~28 MiB (x double-buffer 24 MiB + resident
            # weights + output). 48 MiB keeps headroom and stays under v7x's
            # 64 MiB physical VMEM; well under 128 MiB on v5e/v6e.
            vmem_limit_bytes=48 * 1024 * 1024,
        ),
        cost_estimate=cost,
    )(x_flat, w1, b1_2d, w2_p, b2_p)

    return out_padded[:, :OUT_FEATURES]


def init_params(key):
    """Deterministic init mimicking nn.Linear defaults: U(-1/sqrt(fan_in), +)."""
    k1, k2, k3, k4 = jax.random.split(key, 4)
    bound1 = 1.0 / jnp.sqrt(IN_FEATURES)
    # Stored as (in, out) so the kernel does x @ W (equivalent to torch's x @ W.T).
    w1 = jax.random.uniform(k1, (IN_FEATURES, HIDDEN), jnp.float32, -bound1, bound1)
    b1 = jax.random.uniform(k2, (HIDDEN,), jnp.float32, -bound1, bound1)
    bound2 = 1.0 / jnp.sqrt(HIDDEN)
    w2 = jax.random.uniform(k3, (HIDDEN, OUT_FEATURES), jnp.float32, -bound2, bound2)
    b2 = jax.random.uniform(k4, (OUT_FEATURES,), jnp.float32, -bound2, bound2)
    return w1, b1, w2, b2


if __name__ == "__main__":
    key = jax.random.PRNGKey(0)
    kx, kp = jax.random.split(key)
    w1, b1, w2, b2 = init_params(kp)

    def reference(x):
        xf = x.reshape(x.shape[0], -1)
        return jnp.maximum(xf @ w1 + b1, 0.0) @ w2 + b2

    # Case 1: small batch, single full block.
    x1 = jax.random.normal(kx, (8, 3, 32, 32), jnp.float32)
    out1 = jax.block_until_ready(dnn3_forward(x1, w1, b1, w2, b2))
    assert out1.shape == (8, OUT_FEATURES)
    ref1 = reference(x1)
    assert jnp.allclose(out1, ref1, atol=2e-2, rtol=2e-2), \
        float(jnp.max(jnp.abs(out1 - ref1)))

    # Case 2: multi-step grid with a ragged final block (no padding pass over x).
    x2 = jax.random.normal(kx, (50, 3, 32, 32), jnp.float32)
    out2 = jax.block_until_ready(dnn3_forward(x2, w1, b1, w2, b2, tm=16))
    assert out2.shape == (50, OUT_FEATURES)
    ref2 = reference(x2)
    assert jnp.allclose(out2, ref2, atol=2e-2, rtol=2e-2), \
        float(jnp.max(jnp.abs(out2 - ref2)))

    print("KERNEL_OK")
</pallas_src>

<mosaic_0001>
module attributes {stable_mosaic.version = 11 : i64} {
  func.func @mlp_kernel(%arg0: i32, %arg1: memref<8x3072xf32, #tpu.memory_space<vmem>>, %arg2: memref<3072x16xf32, #tpu.memory_space<vmem>>, %arg3: memref<1x16xf32, #tpu.memory_space<vmem>>, %arg4: memref<16x128xf32, #tpu.memory_space<vmem>>, %arg5: memref<1x128xf32, #tpu.memory_space<vmem>>, %arg6: memref<8x128xf32, #tpu.memory_space<vmem>>) attributes {dimension_semantics = [#tpu.dimension_semantics<parallel>], iteration_bounds = array<i64: 1>, scalar_prefetch = 0 : i64, scratch_operands = 0 : i64, tpu.core_type = #tpu.core_type<tc>, window_params = [{transform_indices = @transform_0, window_bounds = array<i64: 8, 3072>}, {pipeline_mode = #tpu.pipeline_mode<synchronous>, transform_indices = @transform_1, window_bounds = array<i64: 3072, 16>}, {pipeline_mode = #tpu.pipeline_mode<synchronous>, transform_indices = @transform_2, window_bounds = array<i64: 1, 16>}, {pipeline_mode = #tpu.pipeline_mode<synchronous>, transform_indices = @transform_3, window_bounds = array<i64: 16, 128>}, {pipeline_mode = #tpu.pipeline_mode<synchronous>, transform_indices = @transform_4, window_bounds = array<i64: 1, 128>}, {transform_indices = @transform_5, window_bounds = array<i64: 8, 128>}]} {
    %c0 = arith.constant 0 : index
    %c0_0 = arith.constant 0 : index
    %0 = vector.load %arg1[%c0, %c0_0] : memref<8x3072xf32, #tpu.memory_space<vmem>>, vector<8x3072xf32>
    %c0_1 = arith.constant 0 : index
    %c0_2 = arith.constant 0 : index
    %1 = vector.load %arg2[%c0_1, %c0_2] : memref<3072x16xf32, #tpu.memory_space<vmem>>, vector<3072x16xf32>
    %cst = arith.constant dense<0.000000e+00> : vector<8x16xf32>
    %2 = tpu.matmul %0, %1, %cst {dimension_numbers = #tpu.dot_dimension_numbers<[1], [0], [0], [1], [0, 0, 1, 1], [], []>} : vector<8x3072xf32>, vector<3072x16xf32>, vector<8x16xf32> -> vector<8x16xf32>
    %c0_3 = arith.constant 0 : index
    %c0_4 = arith.constant 0 : index
    %3 = vector.load %arg3[%c0_3, %c0_4] : memref<1x16xf32, #tpu.memory_space<vmem>>, vector<1x16xf32>
    %4 = vector.broadcast %3 : vector<1x16xf32> to vector<8x16xf32>
    %5 = arith.addf %2, %4 : vector<8x16xf32>
    %cst_5 = arith.constant 0.000000e+00 : f32
    %6 = vector.broadcast %cst_5 : f32 to vector<8x16xf32>
    %7 = arith.maximumf %5, %6 : vector<8x16xf32>
    %c0_6 = arith.constant 0 : index
    %c0_7 = arith.constant 0 : index
    %8 = vector.load %arg4[%c0_6, %c0_7] : memref<16x128xf32, #tpu.memory_space<vmem>>, vector<16x128xf32>
    %cst_8 = arith.constant dense<0.000000e+00> : vector<8x128xf32>
    %9 = tpu.matmul %7, %8, %cst_8 {dimension_numbers = #tpu.dot_dimension_numbers<[1], [0], [0], [1], [0, 0, 1, 1], [], []>} : vector<8x16xf32>, vector<16x128xf32>, vector<8x128xf32> -> vector<8x128xf32>
    %c0_9 = arith.constant 0 : index
    %c0_10 = arith.constant 0 : index
    %10 = vector.load %arg5[%c0_9, %c0_10] : memref<1x128xf32, #tpu.memory_space<vmem>>, vector<1x128xf32>
    %11 = vector.broadcast %10 : vector<1x128xf32> to vector<8x128xf32>
    %12 = arith.addf %9, %11 : vector<8x128xf32>
    %c0_11 = arith.constant 0 : index
    %c0_12 = arith.constant 0 : index
    %13 = vector.load %arg6[%c0_11, %c0_12] : memref<8x128xf32, #tpu.memory_space<vmem>>, vector<8x128xf32>
    tpu.vector_store %arg6[%c0_11, %c0_12], %12 {strides = array<i32>} : memref<8x128xf32, #tpu.memory_space<vmem>>, vector<8x128xf32>,
    return
  }
  func.func @transform_0(%arg0: i32) -> (i32, i32) {
    %c0_i32 = arith.constant 0 : i32
    %c0_i32_0 = arith.constant 0 : i32
    return %arg0, %c0_i32 : i32, i32
  }
  func.func @transform_1(%arg0: i32) -> (i32, i32) {
    %c0_i32 = arith.constant 0 : i32
    %c0_i32_0 = arith.constant 0 : i32
    %c0_i32_1 = arith.constant 0 : i32
    return %c0_i32, %c0_i32_0 : i32, i32
  }
  func.func @transform_2(%arg0: i32) -> (i32, i32) {
    %c0_i32 = arith.constant 0 : i32
    %c0_i32_0 = arith.constant 0 : i32
    %c0_i32_1 = arith.constant 0 : i32
    return %c0_i32, %c0_i32_0 : i32, i32
  }
  func.func @transform_3(%arg0: i32) -> (i32, i32) {
    %c0_i32 = arith.constant 0 : i32
    %c0_i32_0 = arith.constant 0 : i32
    %c0_i32_1 = arith.constant 0 : i32
    return %c0_i32, %c0_i32_0 : i32, i32
  }
  func.func @transform_4(%arg0: i32) -> (i32, i32) {
    %c0_i32 = arith.constant 0 : i32
    %c0_i32_0 = arith.constant 0 : i32
    %c0_i32_1 = arith.constant 0 : i32
    return %c0_i32, %c0_i32_0 : i32, i32
  }
  func.func @transform_5(%arg0: i32) -> (i32, i32) {
    %c0_i32 = arith.constant 0 : i32
    %c0_i32_0 = arith.constant 0 : i32
    return %arg0, %c0_i32 : i32, i32
  }
}

</mosaic_0001>

<llo_original>
// kernel: dnn3_forward.1
$region0: #{dnn3_forward.1}
  #allocation0 [shape = 'u32[]', space=smem, size = 0x4, offset = 0x4, fixed_abs, tag = 'smem constant byte address 0x4 - core index']
  #allocation1 [shape = 'u32[72,128]{1,0:T(1,128)}', space=vmem, size = 0x9000, scoped, tag = 'internal scratch']
  %s0 = inlined_call_operand.vmem [shape: f32[8,3072], index: 0, kind: input, shape index: {}]
  %s1 = inlined_call_operand.vmem [shape: f32[3072,16], index: 1, kind: input, shape index: {}]
  %s2 = inlined_call_operand.vmem [shape: f32[1,16], index: 2, kind: input, shape index: {}]
  %s3 = inlined_call_operand.vmem [shape: f32[16,128], index: 3, kind: input, shape index: {}]
  %s4 = inlined_call_operand.vmem [shape: f32[1,128], index: 4, kind: input, shape index: {}]
  %s5 = inlined_call_operand.hbm [shape: f32[8,128], index: 5, kind: output, shape index: {}]
  %s6 = sld [smem:[#allocation0]]
  $region30: #{dnn3_forward.1} parent=0
    _
  %s8 = ssub.s32 1, %s6
  %s9 = scalar_select 0, %s8, %s6
  $region1: #{dnn3_forward.1} parent=0
    #allocation2 [shape = 'u8[4096]{0}', space=vmem, size = 0x1000, scoped, tag = 'output window, operand 0, single buffered']
    #allocation3 [shape = 's32[1]{0}', space=sflag, size = 0x4, scoped, tag = 'scoped memory for dnn3_forward.1']
    %10 = vsyncpa [#allocation3], 0
    // Predicated region
    $region2: #{dnn3_forward.1} parent=1 // pred_check
      _
    $region3: #{dnn3_forward.1} parent=1 // pred_check_branch
      %12 = sbr.rel (0) target = $region5
    $region4: #{dnn3_forward.1} parent=1 // pred_region
      _
    $region5: #{dnn3_forward.1} parent=1 // pred_fallthru
      _
    // Predicated region
    $region6: #{dnn3_forward.1} parent=1 // pred_check
      _
    $region7: #{dnn3_forward.1} parent=1 // pred_check_branch
      %14 = sbr.rel (0) target = $region9
    $region8: #{dnn3_forward.1} parent=1 // pred_region
      _
    $region9: #{dnn3_forward.1} parent=1 // pred_fallthru
      _
    // Predicated region
    $region10: #{dnn3_forward.1} parent=1 // pred_check
      _
    $region11: #{dnn3_forward.1} parent=1 // pred_check_branch
      %16 = sbr.rel (0) target = $region13
    $region12: #{dnn3_forward.1} parent=1 // pred_region
      _
    $region13: #{dnn3_forward.1} parent=1 // pred_fallthru
      _
    // Predicated region
    $region14: #{dnn3_forward.1} parent=1 // pred_check
      _
    $region15: #{dnn3_forward.1} parent=1 // pred_check_branch
      %18 = sbr.rel (0) target = $region17
    $region16: #{dnn3_forward.1} parent=1 // pred_region
      _
    $region17: #{dnn3_forward.1} parent=1 // pred_fallthru
      _
    // Predicated region
    $region18: #{dnn3_forward.1} parent=1 // pred_check
      _
    $region19: #{dnn3_forward.1} parent=1 // pred_check_branch
      %20 = sbr.rel (0) target = $region21
    $region20: #{dnn3_forward.1} parent=1 // pred_region
      _
    $region21: #{dnn3_forward.1} parent=1 // pred_fallthru
      _
    %v21 = vld [vmem:[%s0] sm:$0xff]
    %v22 = vld [vmem:[%s0 + $0x8] sm:$0xff]
    %v23 = vld [vmem:[%s0 + $0x10] sm:$0xff]
    %v24 = vld [vmem:[%s0 + $0x18] sm:$0xff]
    %v25 = vld [vmem:[%s0 + $0x20] sm:$0xff]
    %v26 = vld [vmem:[%s0 + $0x28] sm:$0xff]
    %v27 = vld [vmem:[%s0 + $0x30] sm:$0xff]
    %v28 = vld [vmem:[%s0 + $0x38] sm:$0xff]
    %v29 = vld [vmem:[%s0 + $0x40] sm:$0xff]
    %v30 = vld [vmem:[%s0 + $0x48] sm:$0xff]
    %v31 = vld [vmem:[%s0 + $0x50] sm:$0xff]
    %v32 = vld [vmem:[%s0 + $0x58] sm:$0xff]
    %v33 = vld [vmem:[%s0 + $0x60] sm:$0xff]
    %v34 = vld [vmem:[%s0 + $0x68] sm:$0xff]
    %v35 = vld [vmem:[%s0 + $0x70] sm:$0xff]
    %v36 = vld [vmem:[%s0 + $0x78] sm:$0xff]
    %v37 = vld [vmem:[%s0 + $0x80] sm:$0xff]
    %v38 = vld [vmem:[%s0 + $0x88] sm:$0xff]
    %v39 = vld [vmem:[%s0 + $0x90] sm:$0xff]
    %v40 = vld [vmem:[%s0 + $0x98] sm:$0xff]
    %v41 = vld [vmem:[%s0 + $0xa0] sm:$0xff]
    %v42 = vld [vmem:[%s0 + $0xa8] sm:$0xff]
    %v43 = vld [vmem:[%s0 + $0xb0] sm:$0xff]
    %v44 = vld [vmem:[%s0 + $0xb8] sm:$0xff]
    %v45 = vld [vmem:[%s1] sm:$0xff]
    %v46 = vld [vmem:[%s1 + $0x8] sm:$0xff]
    %v47 = vld [vmem:[%s1 + $0x10] sm:$0xff]
    %v48 = vld [vmem:[%s1 + $0x18] sm:$0xff]
    %v49 = vld [vmem:[%s1 + $0x20] sm:$0xff]
    %v50 = vld [vmem:[%s1 + $0x28] sm:$0xff]
    %v51 = vld [vmem:[%s1 + $0x30] sm:$0xff]
    %v52 = vld [vmem:[%s1 + $0x38] sm:$0xff]
    %v53 = vld [vmem:[%s1 + $0x40] sm:$0xff]
    %v54 = vld [vmem:[%s1 + $0x48] sm:$0xff]
    %v55 = vld [vmem:[%s1 + $0x50] sm:$0xff]
    %v56 = vld [vmem:[%s1 + $0x58] sm:$0xff]
    %v57 = vld [vmem:[%s1 + $0x60] sm:$0xff]
    %v58 = vld [vmem:[%s1 + $0x68] sm:$0xff]
    %v59 = vld [vmem:[%s1 + $0x70] sm:$0xff]
    %v60 = vld [vmem:[%s1 + $0x78] sm:$0xff]
    %v61 = vld [vmem:[%s1 + $0x80] sm:$0xff]
    %v62 = vld [vmem:[%s1 + $0x88] sm:$0xff]
    %v63 = vld [vmem:[%s1 + $0x90] sm:$0xff]
    %v64 = vld [vmem:[%s1 + $0x98] sm:$0xff]
    %v65 = vld [vmem:[%s1 + $0xa0] sm:$0xff]
    %v66 = vld [vmem:[%s1 + $0xa8] sm:$0xff]
    %v67 = vld [vmem:[%s1 + $0xb0] sm:$0xff]
    %v68 = vld [vmem:[%s1 + $0xb8] sm:$0xff]
    %v69 = vld [vmem:[%s1 + $0xc0] sm:$0xff]
    %v70 = vld [vmem:[%s1 + $0xc8] sm:$0xff]
    %v71 = vld [vmem:[%s1 + $0xd0] sm:$0xff]
    %v72 = vld [vmem:[%s1 + $0xd8] sm:$0xff]
    %v73 = vld [vmem:[%s1 + $0xe0] sm:$0xff]
    %v74 = vld [vmem:[%s1 + $0xe8] sm:$0xff]
    %v75 = vld [vmem:[%s1 + $0xf0] sm:$0xff]
    %v76 = vld [vmem:[%s1 + $0xf8] sm:$0xff]
    %v77 = vld [vmem:[%s1 + $0x100] sm:$0xff]
    %v78 = vld [vmem:[%s1 + $0x108] sm:$0xff]
    %v79 = vld [vmem:[%s1 + $0x110] sm:$0xff]
    %v80 = vld [vmem:[%s1 + $0x118] sm:$0xff]
    %v81 = vld [vmem:[%s1 + $0x120] sm:$0xff]
    %v82 = vld [vmem:[%s1 + $0x128] sm:$0xff]
    %v83 = vld [vmem:[%s1 + $0x130] sm:$0xff]
    %v84 = vld [vmem:[%s1 + $0x138] sm:$0xff]
    %v85 = vld [vmem:[%s1 + $0x140] sm:$0xff]
    %v86 = vld [vmem:[%s1 + $0x148] sm:$0xff]
    %v87 = vld [vmem:[%s1 + $0x150] sm:$0xff]
    %v88 = vld [vmem:[%s1 + $0x158] sm:$0xff]
    %v89 = vld [vmem:[%s1 + $0x160] sm:$0xff]
    %v90 = vld [vmem:[%s1 + $0x168] sm:$0xff]
    %v91 = vld [vmem:[%s1 + $0x170] sm:$0xff]
    %v92 = vld [vmem:[%s1 + $0x178] sm:$0xff]
    %v93 = vld [vmem:[%s1 + $0x180] sm:$0xff]
    %v94 = vld [vmem:[%s1 + $0x188] sm:$0xff]
    %v95 = vld [vmem:[%s1 + $0x190] sm:$0xff]
    %v96 = vld [vmem:[%s1 + $0x198] sm:$0xff]
    %v97 = vld [vmem:[%s1 + $0x1a0] sm:$0xff]
    %v98 = vld [vmem:[%s1 + $0x1a8] sm:$0xff]
    %v99 = vld [vmem:[%s1 + $0x1b0] sm:$0xff]
    %v100 = vld [vmem:[%s1 + $0x1b8] sm:$0xff]
    %v101 = vld [vmem:[%s1 + $0x1c0] sm:$0xff]
    %v102 = vld [vmem:[%s1 + $0x1c8] sm:$0xff]
    %v103 = vld [vmem:[%s1 + $0x1d0] sm:$0xff]
    %v104 = vld [vmem:[%s1 + $0x1d8] sm:$0xff]
    %v105 = vld [vmem:[%s1 + $0x1e0] sm:$0xff]
    %v106 = vld [vmem:[%s1 + $0x1e8] sm:$0xff]
    %v107 = vld [vmem:[%s1 + $0x1f0] sm:$0xff]
    %v108 = vld [vmem:[%s1 + $0x1f8] sm:$0xff]
    %v109 = vld [vmem:[%s1 + $0x200] sm:$0xff]
    %v110 = vld [vmem:[%s1 + $0x208] sm:$0xff]
    %v111 = vld [vmem:[%s1 + $0x210] sm:$0xff]
    %v112 = vld [vmem:[%s1 + $0x218] sm:$0xff]
    %v113 = vld [vmem:[%s1 + $0x220] sm:$0xff]
    %v114 = vld [vmem:[%s1 + $0x228] sm:$0xff]
    %v115 = vld [vmem:[%s1 + $0x230] sm:$0xff]
    %v116 = vld [vmem:[%s1 + $0x238] sm:$0xff]
    %v117 = vld [vmem:[%s1 + $0x240] sm:$0xff]
    %v118 = vld [vmem:[%s1 + $0x248] sm:$0xff]
    %v119 = vld [vmem:[%s1 + $0x250] sm:$0xff]
    %v120 = vld [vmem:[%s1 + $0x258] sm:$0xff]
    %v121 = vld [vmem:[%s1 + $0x260] sm:$0xff]
    %v122 = vld [vmem:[%s1 + $0x268] sm:$0xff]
    %v123 = vld [vmem:[%s1 + $0x270] sm:$0xff]
    %v124 = vld [vmem:[%s1 + $0x278] sm:$0xff]
    %v125 = vld [vmem:[%s1 + $0x280] sm:$0xff]
    %v126 = vld [vmem:[%s1 + $0x288] sm:$0xff]
    %v127 = vld [vmem:[%s1 + $0x290] sm:$0xff]
    %v128 = vld [vmem:[%s1 + $0x298] sm:$0xff]
    %v129 = vld [vmem:[%s1 + $0x2a0] sm:$0xff]
    %v130 = vld [vmem:[%s1 + $0x2a8] sm:$0xff]
    %v131 = vld [vmem:[%s1 + $0x2b0] sm:$0xff]
    %v132 = vld [vmem:[%s1 + $0x2b8] sm:$0xff]
    %v133 = vld [vmem:[%s1 + $0x2c0] sm:$0xff]
    %v134 = vld [vmem:[%s1 + $0x2c8] sm:$0xff]
    %v135 = vld [vmem:[%s1 + $0x2d0] sm:$0xff]
    %v136 = vld [vmem:[%s1 + $0x2d8] sm:$0xff]
    %v137 = vld [vmem:[%s1 + $0x2e0] sm:$0xff]
    %v138 = vld [vmem:[%s1 + $0x2e8] sm:$0xff]
    %v139 = vld [vmem:[%s1 + $0x2f0] sm:$0xff]
    %v140 = vld [vmem:[%s1 + $0x2f8] sm:$0xff]
    %v141 = vld [vmem:[%s1 + $0x300] sm:$0xff]
    %v142 = vld [vmem:[%s1 + $0x308] sm:$0xff]
    %v143 = vld [vmem:[%s1 + $0x310] sm:$0xff]
    %v144 = vld [vmem:[%s1 + $0x318] sm:$0xff]
    %v145 = vld [vmem:[%s1 + $0x320] sm:$0xff]
    %v146 = vld [vmem:[%s1 + $0x328] sm:$0xff]
    %v147 = vld [vmem:[%s1 + $0x330] sm:$0xff]
    %v148 = vld [vmem:[%s1 + $0x338] sm:$0xff]
    %v149 = vld [vmem:[%s1 + $0x340] sm:$0xff]
    %v150 = vld [vmem:[%s1 + $0x348] sm:$0xff]
    %v151 = vld [vmem:[%s1 + $0x350] sm:$0xff]
    %v152 = vld [vmem:[%s1 + $0x358] sm:$0xff]
    %v153 = vld [vmem:[%s1 + $0x360] sm:$0xff]
    %v154 = vld [vmem:[%s1 + $0x368] sm:$0xff]
    %v155 = vld [vmem:[%s1 + $0x370] sm:$0xff]
    %v156 = vld [vmem:[%s1 + $0x378] sm:$0xff]
    %v157 = vld [vmem:[%s1 + $0x380] sm:$0xff]
    %v158 = vld [vmem:[%s1 + $0x388] sm:$0xff]
    %v159 = vld [vmem:[%s1 + $0x390] sm:$0xff]
    %v160 = vld [vmem:[%s1 + $0x398] sm:$0xff]
    %v161 = vld [vmem:[%s1 + $0x3a0] sm:$0xff]
    %v162 = vld [vmem:[%s1 + $0x3a8] sm:$0xff]
    %v163 = vld [vmem:[%s1 + $0x3b0] sm:$0xff]
    %v164 = vld [vmem:[%s1 + $0x3b8] sm:$0xff]
    %v165 = vld [vmem:[%s1 + $0x3c0] sm:$0xff]
    %v166 = vld [vmem:[%s1 + $0x3c8] sm:$0xff]
    %v167 = vld [vmem:[%s1 + $0x3d0] sm:$0xff]
    %v168 = vld [vmem:[%s1 + $0x3d8] sm:$0xff]
    %v169 = vld [vmem:[%s1 + $0x3e0] sm:$0xff]
    %v170 = vld [vmem:[%s1 + $0x3e8] sm:$0xff]
    %v171 = vld [vmem:[%s1 + $0x3f0] sm:$0xff]
    %v172 = vld [vmem:[%s1 + $0x3f8] sm:$0xff]
    %v173 = vld [vmem:[%s1 + $0x400] sm:$0xff]
    %v174 = vld [vmem:[%s1 + $0x408] sm:$0xff]
    %v175 = vld [vmem:[%s1 + $0x410] sm:$0xff]
    %v176 = vld [vmem:[%s1 + $0x418] sm:$0xff]
    %v177 = vld [vmem:[%s1 + $0x420] sm:$0xff]
    %v178 = vld [vmem:[%s1 + $0x428] sm:$0xff]
    %v179 = vld [vmem:[%s1 + $0x430] sm:$0xff]
    %v180 = vld [vmem:[%s1 + $0x438] sm:$0xff]
    %v181 = vld [vmem:[%s1 + $0x440] sm:$0xff]
    %v182 = vld [vmem:[%s1 + $0x448] sm:$0xff]
    %v183 = vld [vmem:[%s1 + $0x450] sm:$0xff]
    %v184 = vld [vmem:[%s1 + $0x458] sm:$0xff]
    %v185 = vld [vmem:[%s1 + $0x460] sm:$0xff]
    %v186 = vld [vmem:[%s1 + $0x468] sm:$0xff]
    %v187 = vld [vmem:[%s1 + $0x470] sm:$0xff]
    %v188 = vld [vmem:[%s1 + $0x478] sm:$0xff]
    %v189 = vld [vmem:[%s1 + $0x480] sm:$0xff]
    %v190 = vld [vmem:[%s1 + $0x488] sm:$0xff]
    %v191 = vld [vmem:[%s1 + $0x490] sm:$0xff]
    %v192 = vld [vmem:[%s1 + $0x498] sm:$0xff]
    %v193 = vld [vmem:[%s1 + $0x4a0] sm:$0xff]
    %v194 = vld [vmem:[%s1 + $0x4a8] sm:$0xff]
    %v195 = vld [vmem:[%s1 + $0x4b0] sm:$0xff]
    %v196 = vld [vmem:[%s1 + $0x4b8] sm:$0xff]
    %v197 = vld [vmem:[%s1 + $0x4c0] sm:$0xff]
    %v198 = vld [vmem:[%s1 + $0x4c8] sm:$0xff]
    %v199 = vld [vmem:[%s1 + $0x4d0] sm:$0xff]
    %v200 = vld [vmem:[%s1 + $0x4d8] sm:$0xff]
    %v201 = vld [vmem:[%s1 + $0x4e0] sm:$0xff]
    %v202 = vld [vmem:[%s1 + $0x4e8] sm:$0xff]
    %v203 = vld [vmem:[%s1 + $0x4f0] sm:$0xff]
    %v204 = vld [vmem:[%s1 + $0x4f8] sm:$0xff]
    %v205 = vld [vmem:[%s1 + $0x500] sm:$0xff]
    %v206 = vld [vmem:[%s1 + $0x508] sm:$0xff]
    %v207 = vld [vmem:[%s1 + $0x510] sm:$0xff]
    %v208 = vld [vmem:[%s1 + $0x518] sm:$0xff]
    %v209 = vld [vmem:[%s1 + $0x520] sm:$0xff]
    %v210 = vld [vmem:[%s1 + $0x528] sm:$0xff]
    %v211 = vld [vmem:[%s1 + $0x530] sm:$0xff]
    %v212 = vld [vmem:[%s1 + $0x538] sm:$0xff]
    %v213 = vld [vmem:[%s1 + $0x540] sm:$0xff]
    %v214 = vld [vmem:[%s1 + $0x548] sm:$0xff]
    %v215 = vld [vmem:[%s1 + $0x550] sm:$0xff]
    %v216 = vld [vmem:[%s1 + $0x558] sm:$0xff]
    %v217 = vld [vmem:[%s1 + $0x560] sm:$0xff]
    %v218 = vld [vmem:[%s1 + $0x568] sm:$0xff]
    %v219 = vld [vmem:[%s1 + $0x570] sm:$0xff]
    %v220 = vld [vmem:[%s1 + $0x578] sm:$0xff]
    %v221 = vld [vmem:[%s1 + $0x580] sm:$0xff]
    %v222 = vld [vmem:[%s1 + $0x588] sm:$0xff]
    %v223 = vld [vmem:[%s1 + $0x590] sm:$0xff]
    %v224 = vld [vmem:[%s1 + $0x598] sm:$0xff]
    %v225 = vld [vmem:[%s1 + $0x5a0] sm:$0xff]
    %v226 = vld [vmem:[%s1 + $0x5a8] sm:$0xff]
    %v227 = vld [vmem:[%s1 + $0x5b0] sm:$0xff]
    %v228 = vld [vmem:[%s1 + $0x5b8] sm:$0xff]
    %v229 = vld [vmem:[%s1 + $0x5c0] sm:$0xff]
    %v230 = vld [vmem:[%s1 + $0x5c8] sm:$0xff]
    %v231 = vld [vmem:[%s1 + $0x5d0] sm:$0xff]
    %v232 = vld [vmem:[%s1 + $0x5d8] sm:$0xff]
    %v233 = vld [vmem:[%s1 + $0x5e0] sm:$0xff]
    %v234 = vld [vmem:[%s1 + $0x5e8] sm:$0xff]
    %v235 = vld [vmem:[%s1 + $0x5f0] sm:$0xff]
    %v236 = vld [vmem:[%s1 + $0x5f8] sm:$0xff]
    %v237 = vld [vmem:[%s1 + $0x600] sm:$0xff]
    %v238 = vld [vmem:[%s1 + $0x608] sm:$0xff]
    %v239 = vld [vmem:[%s1 + $0x610] sm:$0xff]
    %v240 = vld [vmem:[%s1 + $0x618] sm:$0xff]
    %v241 = vld [vmem:[%s1 + $0x620] sm:$0xff]
    %v242 = vld [vmem:[%s1 + $0x628] sm:$0xff]
    %v243 = vld [vmem:[%s1 + $0x630] sm:$0xff]
    %v244 = vld [vmem:[%s1 + $0x638] sm:$0xff]
    %v245 = vld [vmem:[%s1 + $0x640] sm:$0xff]
    %v246 = vld [vmem:[%s1 + $0x648] sm:$0xff]
    %v247 = vld [vmem:[%s1 + $0x650] sm:$0xff]
    %v248 = vld [vmem:[%s1 + $0x658] sm:$0xff]
    %v249 = vld [vmem:[%s1 + $0x660] sm:$0xff]
    %v250 = vld [vmem:[%s1 + $0x668] sm:$0xff]
    %v251 = vld [vmem:[%s1 + $0x670] sm:$0xff]
    %v252 = vld [vmem:[%s1 + $0x678] sm:$0xff]
    %v253 = vld [vmem:[%s1 + $0x680] sm:$0xff]
    %v254 = vld [vmem:[%s1 + $0x688] sm:$0xff]
    %v255 = vld [vmem:[%s1 + $0x690] sm:$0xff]
    %v256 = vld [vmem:[%s1 + $0x698] sm:$0xff]
    %v257 = vld [vmem:[%s1 + $0x6a0] sm:$0xff]
    %v258 = vld [vmem:[%s1 + $0x6a8] sm:$0xff]
    %v259 = vld [vmem:[%s1 + $0x6b0] sm:$0xff]
    %v260 = vld [vmem:[%s1 + $0x6b8] sm:$0xff]
    %v261 = vld [vmem:[%s1 + $0x6c0] sm:$0xff]
    %v262 = vld [vmem:[%s1 + $0x6c8] sm:$0xff]
    %v263 = vld [vmem:[%s1 + $0x6d0] sm:$0xff]
    %v264 = vld [vmem:[%s1 + $0x6d8] sm:$0xff]
    %v265 = vld [vmem:[%s1 + $0x6e0] sm:$0xff]
    %v266 = vld [vmem:[%s1 + $0x6e8] sm:$0xff]
    %v267 = vld [vmem:[%s1 + $0x6f0] sm:$0xff]
    %v268 = vld [vmem:[%s1 + $0x6f8] sm:$0xff]
    %v269 = vld [vmem:[%s1 + $0x700] sm:$0xff]
    %v270 = vld [vmem:[%s1 + $0x708] sm:$0xff]
    %v271 = vld [vmem:[%s1 + $0x710] sm:$0xff]
    %v272 = vld [vmem:[%s1 + $0x718] sm:$0xff]
    %v273 = vld [vmem:[%s1 + $0x720] sm:$0xff]
    %v274 = vld [vmem:[%s1 + $0x728] sm:$0xff]
    %v275 = vld [vmem:[%s1 + $0x730] sm:$0xff]
    %v276 = vld [vmem:[%s1 + $0x738] sm:$0xff]
    %v277 = vld [vmem:[%s1 + $0x740] sm:$0xff]
    %v278 = vld [vmem:[%s1 + $0x748] sm:$0xff]
    %v279 = vld [vmem:[%s1 + $0x750] sm:$0xff]
    %v280 = vld [vmem:[%s1 + $0x758] sm:$0xff]
    %v281 = vld [vmem:[%s1 + $0x760] sm:$0xff]
    %v282 = vld [vmem:[%s1 + $0x768] sm:$0xff]
    %v283 = vld [vmem:[%s1 + $0x770] sm:$0xff]
    %v284 = vld [vmem:[%s1 + $0x778] sm:$0xff]
    %v285 = vld [vmem:[%s1 + $0x780] sm:$0xff]
    %v286 = vld [vmem:[%s1 + $0x788] sm:$0xff]
    %v287 = vld [vmem:[%s1 + $0x790] sm:$0xff]
    %v288 = vld [vmem:[%s1 + $0x798] sm:$0xff]
    %v289 = vld [vmem:[%s1 + $0x7a0] sm:$0xff]
    %v290 = vld [vmem:[%s1 + $0x7a8] sm:$0xff]
    %v291 = vld [vmem:[%s1 + $0x7b0] sm:$0xff]
    %v292 = vld [vmem:[%s1 + $0x7b8] sm:$0xff]
    %v293 = vld [vmem:[%s1 + $0x7c0] sm:$0xff]
    %v294 = vld [vmem:[%s1 + $0x7c8] sm:$0xff]
    %v295 = vld [vmem:[%s1 + $0x7d0] sm:$0xff]
    %v296 = vld [vmem:[%s1 + $0x7d8] sm:$0xff]
    %v297 = vld [vmem:[%s1 + $0x7e0] sm:$0xff]
    %v298 = vld [vmem:[%s1 + $0x7e8] sm:$0xff]
    %v299 = vld [vmem:[%s1 + $0x7f0] sm:$0xff]
    %v300 = vld [vmem:[%s1 + $0x7f8] sm:$0xff]
    %v301 = vld [vmem:[%s1 + $0x800] sm:$0xff]
    %v302 = vld [vmem:[%s1 + $0x808] sm:$0xff]
    %v303 = vld [vmem:[%s1 + $0x810] sm:$0xff]
    %v304 = vld [vmem:[%s1 + $0x818] sm:$0xff]
    %v305 = vld [vmem:[%s1 + $0x820] sm:$0xff]
    %v306 = vld [vmem:[%s1 + $0x828] sm:$0xff]
    %v307 = vld [vmem:[%s1 + $0x830] sm:$0xff]
    %v308 = vld [vmem:[%s1 + $0x838] sm:$0xff]
    %v309 = vld [vmem:[%s1 + $0x840] sm:$0xff]
    %v310 = vld [vmem:[%s1 + $0x848] sm:$0xff]
    %v311 = vld [vmem:[%s1 + $0x850] sm:$0xff]
    %v312 = vld [vmem:[%s1 + $0x858] sm:$0xff]
    %v313 = vld [vmem:[%s1 + $0x860] sm:$0xff]
    %v314 = vld [vmem:[%s1 + $0x868] sm:$0xff]
    %v315 = vld [vmem:[%s1 + $0x870] sm:$0xff]
    %v316 = vld [vmem:[%s1 + $0x878] sm:$0xff]
    %v317 = vld [vmem:[%s1 + $0x880] sm:$0xff]
    %v318 = vld [vmem:[%s1 + $0x888] sm:$0xff]
    %v319 = vld [vmem:[%s1 + $0x890] sm:$0xff]
    %v320 = vld [vmem:[%s1 + $0x898] sm:$0xff]
    %v321 = vld [vmem:[%s1 + $0x8a0] sm:$0xff]
    %v322 = vld [vmem:[%s1 + $0x8a8] sm:$0xff]
    %v323 = vld [vmem:[%s1 + $0x8b0] sm:$0xff]
    %v324 = vld [vmem:[%s1 + $0x8b8] sm:$0xff]
    %v325 = vld [vmem:[%s1 + $0x8c0] sm:$0xff]
    %v326 = vld [vmem:[%s1 + $0x8c8] sm:$0xff]
    %v327 = vld [vmem:[%s1 + $0x8d0] sm:$0xff]
    %v328 = vld [vmem:[%s1 + $0x8d8] sm:$0xff]
    %v329 = vld [vmem:[%s1 + $0x8e0] sm:$0xff]
    %v330 = vld [vmem:[%s1 + $0x8e8] sm:$0xff]
    %v331 = vld [vmem:[%s1 + $0x8f0] sm:$0xff]
    %v332 = vld [vmem:[%s1 + $0x8f8] sm:$0xff]
    %v333 = vld [vmem:[%s1 + $0x900] sm:$0xff]
    %v334 = vld [vmem:[%s1 + $0x908] sm:$0xff]
    %v335 = vld [vmem:[%s1 + $0x910] sm:$0xff]
    %v336 = vld [vmem:[%s1 + $0x918] sm:$0xff]
    %v337 = vld [vmem:[%s1 + $0x920] sm:$0xff]
    %v338 = vld [vmem:[%s1 + $0x928] sm:$0xff]
    %v339 = vld [vmem:[%s1 + $0x930] sm:$0xff]
    %v340 = vld [vmem:[%s1 + $0x938] sm:$0xff]
    %v341 = vld [vmem:[%s1 + $0x940] sm:$0xff]
    %v342 = vld [vmem:[%s1 + $0x948] sm:$0xff]
    %v343 = vld [vmem:[%s1 + $0x950] sm:$0xff]
    %v344 = vld [vmem:[%s1 + $0x958] sm:$0xff]
    %v345 = vld [vmem:[%s1 + $0x960] sm:$0xff]
    %v346 = vld [vmem:[%s1 + $0x968] sm:$0xff]
    %v347 = vld [vmem:[%s1 + $0x970] sm:$0xff]
    %v348 = vld [vmem:[%s1 + $0x978] sm:$0xff]
    %v349 = vld [vmem:[%s1 + $0x980] sm:$0xff]
    %v350 = vld [vmem:[%s1 + $0x988] sm:$0xff]
    %v351 = vld [vmem:[%s1 + $0x990] sm:$0xff]
    %v352 = vld [vmem:[%s1 + $0x998] sm:$0xff]
    %v353 = vld [vmem:[%s1 + $0x9a0] sm:$0xff]
    %v354 = vld [vmem:[%s1 + $0x9a8] sm:$0xff]
    %v355 = vld [vmem:[%s1 + $0x9b0] sm:$0xff]
    %v356 = vld [vmem:[%s1 + $0x9b8] sm:$0xff]
    %v357 = vld [vmem:[%s1 + $0x9c0] sm:$0xff]
    %v358 = vld [vmem:[%s1 + $0x9c8] sm:$0xff]
    %v359 = vld [vmem:[%s1 + $0x9d0] sm:$0xff]
    %v360 = vld [vmem:[%s1 + $0x9d8] sm:$0xff]
    %v361 = vld [vmem:[%s1 + $0x9e0] sm:$0xff]
    %v362 = vld [vmem:[%s1 + $0x9e8] sm:$0xff]
    %v363 = vld [vmem:[%s1 + $0x9f0] sm:$0xff]
    %v364 = vld [vmem:[%s1 + $0x9f8] sm:$0xff]
    %v365 = vld [vmem:[%s1 + $0xa00] sm:$0xff]
    %v366 = vld [vmem:[%s1 + $0xa08] sm:$0xff]
    %v367 = vld [vmem:[%s1 + $0xa10] sm:$0xff]
    %v368 = vld [vmem:[%s1 + $0xa18] sm:$0xff]
    %v369 = vld [vmem:[%s1 + $0xa20] sm:$0xff]
    %v370 = vld [vmem:[%s1 + $0xa28] sm:$0xff]
    %v371 = vld [vmem:[%s1 + $0xa30] sm:$0xff]
    %v372 = vld [vmem:[%s1 + $0xa38] sm:$0xff]
    %v373 = vld [vmem:[%s1 + $0xa40] sm:$0xff]
    %v374 = vld [vmem:[%s1 + $0xa48] sm:$0xff]
    %v375 = vld [vmem:[%s1 + $0xa50] sm:$0xff]
    %v376 = vld [vmem:[%s1 + $0xa58] sm:$0xff]
    %v377 = vld [vmem:[%s1 + $0xa60] sm:$0xff]
    %v378 = vld [vmem:[%s1 + $0xa68] sm:$0xff]
    %v379 = vld [vmem:[%s1 + $0xa70] sm:$0xff]
    %v380 = vld [vmem:[%s1 + $0xa78] sm:$0xff]
    %v381 = vld [vmem:[%s1 + $0xa80] sm:$0xff]
    %v382 = vld [vmem:[%s1 + $0xa88] sm:$0xff]
    %v383 = vld [vmem:[%s1 + $0xa90] sm:$0xff]
    %v384 = vld [vmem:[%s1 + $0xa98] sm:$0xff]
    %v385 = vld [vmem:[%s1 + $0xaa0] sm:$0xff]
    %v386 = vld [vmem:[%s1 + $0xaa8] sm:$0xff]
    %v387 = vld [vmem:[%s1 + $0xab0] sm:$0xff]
    %v388 = vld [vmem:[%s1 + $0xab8] sm:$0xff]
    %v389 = vld [vmem:[%s1 + $0xac0] sm:$0xff]
    %v390 = vld [vmem:[%s1 + $0xac8] sm:$0xff]
    %v391 = vld [vmem:[%s1 + $0xad0] sm:$0xff]
    %v392 = vld [vmem:[%s1 + $0xad8] sm:$0xff]
    %v393 = vld [vmem:[%s1 + $0xae0] sm:$0xff]
    %v394 = vld [vmem:[%s1 + $0xae8] sm:$0xff]
    %v395 = vld [vmem:[%s1 + $0xaf0] sm:$0xff]
    %v396 = vld [vmem:[%s1 + $0xaf8] sm:$0xff]
    %v397 = vld [vmem:[%s1 + $0xb00] sm:$0xff]
    %v398 = vld [vmem:[%s1 + $0xb08] sm:$0xff]
    %v399 = vld [vmem:[%s1 + $0xb10] sm:$0xff]
    %v400 = vld [vmem:[%s1 + $0xb18] sm:$0xff]
    %v401 = vld [vmem:[%s1 + $0xb20] sm:$0xff]
    %v402 = vld [vmem:[%s1 + $0xb28] sm:$0xff]
    %v403 = vld [vmem:[%s1 + $0xb30] sm:$0xff]
    %v404 = vld [vmem:[%s1 + $0xb38] sm:$0xff]
    %v405 = vld [vmem:[%s1 + $0xb40] sm:$0xff]
    %v406 = vld [vmem:[%s1 + $0xb48] sm:$0xff]
    %v407 = vld [vmem:[%s1 + $0xb50] sm:$0xff]
    %v408 = vld [vmem:[%s1 + $0xb58] sm:$0xff]
    %v409 = vld [vmem:[%s1 + $0xb60] sm:$0xff]
    %v410 = vld [vmem:[%s1 + $0xb68] sm:$0xff]
    %v411 = vld [vmem:[%s1 + $0xb70] sm:$0xff]
    %v412 = vld [vmem:[%s1 + $0xb78] sm:$0xff]
    %v413 = vld [vmem:[%s1 + $0xb80] sm:$0xff]
    %v414 = vld [vmem:[%s1 + $0xb88] sm:$0xff]
    %v415 = vld [vmem:[%s1 + $0xb90] sm:$0xff]
    %v416 = vld [vmem:[%s1 + $0xb98] sm:$0xff]
    %v417 = vld [vmem:[%s1 + $0xba0] sm:$0xff]
    %v418 = vld [vmem:[%s1 + $0xba8] sm:$0xff]
    %v419 = vld [vmem:[%s1 + $0xbb0] sm:$0xff]
    %v420 = vld [vmem:[%s1 + $0xbb8] sm:$0xff]
    %v421 = vld [vmem:[%s1 + $0xbc0] sm:$0xff]
    %v422 = vld [vmem:[%s1 + $0xbc8] sm:$0xff]
    %v423 = vld [vmem:[%s1 + $0xbd0] sm:$0xff]
    %v424 = vld [vmem:[%s1 + $0xbd8] sm:$0xff]
    %v425 = vld [vmem:[%s1 + $0xbe0] sm:$0xff]
    %v426 = vld [vmem:[%s1 + $0xbe8] sm:$0xff]
    %v427 = vld [vmem:[%s1 + $0xbf0] sm:$0xff]
    %v428 = vld [vmem:[%s1 + $0xbf8] sm:$0xff]
    %v429 = vld [vmem:[%s2] sm:$0x1]
    %v431 = vperm.slane %v429, 0
    %433 = vmatpush.msra.mxu0 %v60
    %434 = vmatpush.msra.mxu0 %v59
    %435 = vmatpush.msra.mxu0 %v58
    %436 = vmatpush.msra.mxu0 %v57
    %437 = vmatpush.msra.mxu0 %v56
    %438 = vmatpush.msra.mxu0 %v55
    %439 = vmatpush.msra.mxu0 %v54
    %440 = vmatpush.msra.mxu0 %v53
    %441 = vmatpush.msra.mxu0 %v52
    %442 = vmatpush.msra.mxu0 %v51
    %443 = vmatpush.msra.mxu0 %v50
    %444 = vmatpush.msra.mxu0 %v49
    %445 = vmatpush.msra.mxu0 %v48
    %446 = vmatpush.msra.mxu0 %v47
    %447 = vmatpush.msra.mxu0 %v46
    %448 = vmatpush.msra.mxu0 %v45
    %449 = vmatmul.f32.gmra.mxu0 %v21
    %v450 = vpop.f32.mrf.mxu0
    %v451 = vadd.f32 %v431, %v450
    %452 = vdwg.mxu0
    %453 = vmatpush.msra.mxu0 %v76
    %454 = vmatpush.msra.mxu0 %v75
    %455 = vmatpush.msra.mxu0 %v74
    %456 = vmatpush.msra.mxu0 %v73
    %457 = vmatpush.msra.mxu0 %v72
    %458 = vmatpush.msra.mxu0 %v71
    %459 = vmatpush.msra.mxu0 %v70
    %460 = vmatpush.msra.mxu0 %v69
    %461 = vmatpush.msra.mxu0 %v68
    %462 = vmatpush.msra.mxu0 %v67
    %463 = vmatpush.msra.mxu0 %v66
    %464 = vmatpush.msra.mxu0 %v65
    %465 = vmatpush.msra.mxu0 %v64
    %466 = vmatpush.msra.mxu0 %v63
    %467 = vmatpush.msra.mxu0 %v62
    %468 = vmatpush.msra.mxu0 %v61
    %469 = vmatmul.f32.gmra.mxu0 %v22
    %v470 = vpop.f32.mrf.mxu0
    %v471 = vadd.f32 %v451, %v470
    %472 = vdwg.mxu0
    %473 = vmatpush.msra.mxu0 %v92
    %474 = vmatpush.msra.mxu0 %v91
    %475 = vmatpush.msra.mxu0 %v90
    %476 = vmatpush.msra.mxu0 %v89
    %477 = vmatpush.msra.mxu0 %v88
    %478 = vmatpush.msra.mxu0 %v87
    %479 = vmatpush.msra.mxu0 %v86
    %480 = vmatpush.msra.mxu0 %v85
    %481 = vmatpush.msra.mxu0 %v84
    %482 = vmatpush.msra.mxu0 %v83
    %483 = vmatpush.msra.mxu0 %v82
    %484 = vmatpush.msra.mxu0 %v81
    %485 = vmatpush.msra.mxu0 %v80
    %486 = vmatpush.msra.mxu0 %v79
    %487 = vmatpush.msra.mxu0 %v78
    %488 = vmatpush.msra.mxu0 %v77
    %489 = vmatmul.f32.gmra.mxu0 %v23
    %v490 = vpop.f32.mrf.mxu0
    %v491 = vadd.f32 %v471, %v490
    %492 = vdwg.mxu0
    %493 = vmatpush.msra.mxu0 %v108
    %494 = vmatpush.msra.mxu0 %v107
    %495 = vmatpush.msra.mxu0 %v106
    %496 = vmatpush.msra.mxu0 %v105
    %497 = vmatpush.msra.mxu0 %v104
    %498 = vmatpush.msra.mxu0 %v103
    %499 = vmatpush.msra.mxu0 %v102
    %500 = vmatpush.msra.mxu0 %v101
    %501 = vmatpush.msra.mxu0 %v100
    %502 = vmatpush.msra.mxu0 %v99
    %503 = vmatpush.msra.mxu0 %v98
    %504 = vmatpush.msra.mxu0 %v97
    %505 = vmatpush.msra.mxu0 %v96
    %506 = vmatpush.msra.mxu0 %v95
    %507 = vmatpush.msra.mxu0 %v94
    %508 = vmatpush.msra.mxu0 %v93
    %509 = vmatmul.f32.gmra.mxu0 %v24
    %v510 = vpop.f32.mrf.mxu0
    %v511 = vadd.f32 %v491, %v510
    %512 = vdwg.mxu0
    %513 = vmatpush.msra.mxu0 %v124
    %514 = vmatpush.msra.mxu0 %v123
    %515 = vmatpush.msra.mxu0 %v122
    %516 = vmatpush.msra.mxu0 %v121
    %517 = vmatpush.msra.mxu0 %v120
    %518 = vmatpush.msra.mxu0 %v119
    %519 = vmatpush.msra.mxu0 %v118
    %520 = vmatpush.msra.mxu0 %v117
    %521 = vmatpush.msra.mxu0 %v116
    %522 = vmatpush.msra.mxu0 %v115
    %523 = vmatpush.msra.mxu0 %v114
    %524 = vmatpush.msra.mxu0 %v113
    %525 = vmatpush.msra.mxu0 %v112
    %526 = vmatpush.msra.mxu0 %v111
    %527 = vmatpush.msra.mxu0 %v110
    %528 = vmatpush.msra.mxu0 %v109
    %529 = vmatmul.f32.gmra.mxu0 %v25
    %v530 = vpop.f32.mrf.mxu0
    %v531 = vadd.f32 %v511, %v530
    %532 = vdwg.mxu0
    %533 = vmatpush.msra.mxu0 %v140
    %534 = vmatpush.msra.mxu0 %v139
    %535 = vmatpush.msra.mxu0 %v138
    %536 = vmatpush.msra.mxu0 %v137
    %537 = vmatpush.msra.mxu0 %v136
    %538 = vmatpush.msra.mxu0 %v135
    %539 = vmatpush.msra.mxu0 %v134
    %540 = vmatpush.msra.mxu0 %v133
    %541 = vmatpush.msra.mxu0 %v132
    %542 = vmatpush.msra.mxu0 %v131
    %543 = vmatpush.msra.mxu0 %v130
    %544 = vmatpush.msra.mxu0 %v129
    %545 = vmatpush.msra.mxu0 %v128
    %546 = vmatpush.msra.mxu0 %v127
    %547 = vmatpush.msra.mxu0 %v126
    %548 = vmatpush.msra.mxu0 %v125
    %549 = vmatmul.f32.gmra.mxu0 %v26
    %v550 = vpop.f32.mrf.mxu0
    %v551 = vadd.f32 %v531, %v550
    %552 = vdwg.mxu0
    %553 = vmatpush.msra.mxu0 %v156
    %554 = vmatpush.msra.mxu0 %v155
    %555 = vmatpush.msra.mxu0 %v154
    %556 = vmatpush.msra.mxu0 %v153
    %557 = vmatpush.msra.mxu0 %v152
    %558 = vmatpush.msra.mxu0 %v151
    %559 = vmatpush.msra.mxu0 %v150
    %560 = vmatpush.msra.mxu0 %v149
    %561 = vmatpush.msra.mxu0 %v148
    %562 = vmatpush.msra.mxu0 %v147
    %563 = vmatpush.msra.mxu0 %v146
    %564 = vmatpush.msra.mxu0 %v145
    %565 = vmatpush.msra.mxu0 %v144
    %566 = vmatpush.msra.mxu0 %v143
    %567 = vmatpush.msra.mxu0 %v142
    %568 = vmatpush.msra.mxu0 %v141
    %569 = vmatmul.f32.gmra.mxu0 %v27
    %v570 = vpop.f32.mrf.mxu0
    %v571 = vadd.f32 %v551, %v570
    %572 = vdwg.mxu0
    %573 = vmatpush.msra.mxu0 %v172
    %574 = vmatpush.msra.mxu0 %v171
    %575 = vmatpush.msra.mxu0 %v170
    %576 = vmatpush.msra.mxu0 %v169
    %577 = vmatpush.msra.mxu0 %v168
    %578 = vmatpush.msra.mxu0 %v167
    %579 = vmatpush.msra.mxu0 %v166
    %580 = vmatpush.msra.mxu0 %v165
    %581 = vmatpush.msra.mxu0 %v164
    %582 = vmatpush.msra.mxu0 %v163
    %583 = vmatpush.msra.mxu0 %v162
    %584 = vmatpush.msra.mxu0 %v161
    %585 = vmatpush.msra.mxu0 %v160
    %586 = vmatpush.msra.mxu0 %v159
    %587 = vmatpush.msra.mxu0 %v158
    %588 = vmatpush.msra.mxu0 %v157
    %589 = vmatmul.f32.gmra.mxu0 %v28
    %v590 = vpop.f32.mrf.mxu0
    %v591 = vadd.f32 %v571, %v590
    %592 = vdwg.mxu0
    %593 = vmatpush.msra.mxu0 %v188
    %594 = vmatpush.msra.mxu0 %v187
    %595 = vmatpush.msra.mxu0 %v186
    %596 = vmatpush.msra.mxu0 %v185
    %597 = vmatpush.msra.mxu0 %v184
    %598 = vmatpush.msra.mxu0 %v183
    %599 = vmatpush.msra.mxu0 %v182
    %600 = vmatpush.msra.mxu0 %v181
    %601 = vmatpush.msra.mxu0 %v180
    %602 = vmatpush.msra.mxu0 %v179
    %603 = vmatpush.msra.mxu0 %v178
    %604 = vmatpush.msra.mxu0 %v177
    %605 = vmatpush.msra.mxu0 %v176
    %606 = vmatpush.msra.mxu0 %v175
    %607 = vmatpush.msra.mxu0 %v174
    %608 = vmatpush.msra.mxu0 %v173
    %609 = vmatmul.f32.gmra.mxu0 %v29
    %v610 = vpop.f32.mrf.mxu0
    %v611 = vadd.f32 %v591, %v610
    %612 = vdwg.mxu0
    %613 = vmatpush.msra.mxu0 %v204
    %614 = vmatpush.msra.mxu0 %v203
    %615 = vmatpush.msra.mxu0 %v202
    %616 = vmatpush.msra.mxu0 %v201
    %617 = vmatpush.msra.mxu0 %v200
    %618 = vmatpush.msra.mxu0 %v199
    %619 = vmatpush.msra.mxu0 %v198
    %620 = vmatpush.msra.mxu0 %v197
    %621 = vmatpush.msra.mxu0 %v196
    %622 = vmatpush.msra.mxu0 %v195
    %623 = vmatpush.msra.mxu0 %v194
    %624 = vmatpush.msra.mxu0 %v193
    %625 = vmatpush.msra.mxu0 %v192
    %626 = vmatpush.msra.mxu0 %v191
    %627 = vmatpush.msra.mxu0 %v190
    %628 = vmatpush.msra.mxu0 %v189
    %629 = vmatmul.f32.gmra.mxu0 %v30
    %v630 = vpop.f32.mrf.mxu0
    %v631 = vadd.f32 %v611, %v630
    %632 = vdwg.mxu0
    %633 = vmatpush.msra.mxu0 %v220
    %634 = vmatpush.msra.mxu0 %v219
    %635 = vmatpush.msra.mxu0 %v218
    %636 = vmatpush.msra.mxu0 %v217
    %637 = vmatpush.msra.mxu0 %v216
    %638 = vmatpush.msra.mxu0 %v215
    %639 = vmatpush.msra.mxu0 %v214
    %640 = vmatpush.msra.mxu0 %v213
    %641 = vmatpush.msra.mxu0 %v212
    %642 = vmatpush.msra.mxu0 %v211
    %643 = vmatpush.msra.mxu0 %v210
    %644 = vmatpush.msra.mxu0 %v209
    %645 = vmatpush.msra.mxu0 %v208
    %646 = vmatpush.msra.mxu0 %v207
    %647 = vmatpush.msra.mxu0 %v206
    %648 = vmatpush.msra.mxu0 %v205
    %649 = vmatmul.f32.gmra.mxu0 %v31
    %v650 = vpop.f32.mrf.mxu0
    %v651 = vadd.f32 %v631, %v650
    %652 = vdwg.mxu0
    %653 = vmatpush.msra.mxu0 %v236
    %654 = vmatpush.msra.mxu0 %v235
    %655 = vmatpush.msra.mxu0 %v234
    %656 = vmatpush.msra.mxu0 %v233
    %657 = vmatpush.msra.mxu0 %v232
    %658 = vmatpush.msra.mxu0 %v231
    %659 = vmatpush.msra.mxu0 %v230
    %660 = vmatpush.msra.mxu0 %v229
    %661 = vmatpush.msra.mxu0 %v228
    %662 = vmatpush.msra.mxu0 %v227
    %663 = vmatpush.msra.mxu0 %v226
    %664 = vmatpush.msra.mxu0 %v225
    %665 = vmatpush.msra.mxu0 %v224
    %666 = vmatpush.msra.mxu0 %v223
    %667 = vmatpush.msra.mxu0 %v222
    %668 = vmatpush.msra.mxu0 %v221
    %669 = vmatmul.f32.gmra.mxu0 %v32
    %v670 = vpop.f32.mrf.mxu0
    %v671 = vadd.f32 %v651, %v670
    %672 = vdwg.mxu0
    %673 = vmatpush.msra.mxu0 %v252
    %674 = vmatpush.msra.mxu0 %v251
    %675 = vmatpush.msra.mxu0 %v250
    %676 = vmatpush.msra.mxu0 %v249
    %677 = vmatpush.msra.mxu0 %v248
    %678 = vmatpush.msra.mxu0 %v247
    %679 = vmatpush.msra.mxu0 %v246
    %680 = vmatpush.msra.mxu0 %v245
    %681 = vmatpush.msra.mxu0 %v244
    %682 = vmatpush.msra.mxu0 %v243
    %683 = vmatpush.msra.mxu0 %v242
    %684 = vmatpush.msra.mxu0 %v241
    %685 = vmatpush.msra.mxu0 %v240
    %686 = vmatpush.msra.mxu0 %v239
    %687 = vmatpush.msra.mxu0 %v238
    %688 = vmatpush.msra.mxu0 %v237
    %689 = vmatmul.f32.gmra.mxu0 %v33
    %v690 = vpop.f32.mrf.mxu0
    %v691 = vadd.f32 %v671, %v690
    %692 = vdwg.mxu0
    %693 = vmatpush.msra.mxu0 %v268
    %694 = vmatpush.msra.mxu0 %v267
    %695 = vmatpush.msra.mxu0 %v266
    %696 = vmatpush.msra.mxu0 %v265
    %697 = vmatpush.msra.mxu0 %v264
    %698 = vmatpush.msra.mxu0 %v263
    %699 = vmatpush.msra.mxu0 %v262
    %700 = vmatpush.msra.mxu0 %v261
    %701 = vmatpush.msra.mxu0 %v260
    %702 = vmatpush.msra.mxu0 %v259
    %703 = vmatpush.msra.mxu0 %v258
    %704 = vmatpush.msra.mxu0 %v257
    %705 = vmatpush.msra.mxu0 %v256
    %706 = vmatpush.msra.mxu0 %v255
    %707 = vmatpush.msra.mxu0 %v254
    %708 = vmatpush.msra.mxu0 %v253
    %709 = vmatmul.f32.gmra.mxu0 %v34
    %v710 = vpop.f32.mrf.mxu0
    %v711 = vadd.f32 %v691, %v710
    %712 = vdwg.mxu0
    %713 = vmatpush.msra.mxu0 %v284
    %714 = vmatpush.msra.mxu0 %v283
    %715 = vmatpush.msra.mxu0 %v282
    %716 = vmatpush.msra.mxu0 %v281
    %717 = vmatpush.msra.mxu0 %v280
    %718 = vmatpush.msra.mxu0 %v279
    %719 = vmatpush.msra.mxu0 %v278
    %720 = vmatpush.msra.mxu0 %v277
    %721 = vmatpush.msra.mxu0 %v276
    %722 = vmatpush.msra.mxu0 %v275
    %723 = vmatpush.msra.mxu0 %v274
    %724 = vmatpush.msra.mxu0 %v273
    %725 = vmatpush.msra.mxu0 %v272
    %726 = vmatpush.msra.mxu0 %v271
    %727 = vmatpush.msra.mxu0 %v270
    %728 = vmatpush.msra.mxu0 %v269
    %729 = vmatmul.f32.gmra.mxu0 %v35
    %v730 = vpop.f32.mrf.mxu0
    %v731 = vadd.f32 %v711, %v730
    %732 = vdwg.mxu0
    %733 = vmatpush.msra.mxu0 %v300
    %734 = vmatpush.msra.mxu0 %v299
    %735 = vmatpush.msra.mxu0 %v298
    %736 = vmatpush.msra.mxu0 %v297
    %737 = vmatpush.msra.mxu0 %v296
    %738 = vmatpush.msra.mxu0 %v295
    %739 = vmatpush.msra.mxu0 %v294
    %740 = vmatpush.msra.mxu0 %v293
    %741 = vmatpush.msra.mxu0 %v292
    %742 = vmatpush.msra.mxu0 %v291
    %743 = vmatpush.msra.mxu0 %v290
    %744 = vmatpush.msra.mxu0 %v289
    %745 = vmatpush.msra.mxu0 %v288
    %746 = vmatpush.msra.mxu0 %v287
    %747 = vmatpush.msra.mxu0 %v286
    %748 = vmatpush.msra.mxu0 %v285
    %749 = vmatmul.f32.gmra.mxu0 %v36
    %v750 = vpop.f32.mrf.mxu0
    %v751 = vadd.f32 %v731, %v750
    %752 = vdwg.mxu0
    %753 = vmatpush.msra.mxu0 %v316
    %754 = vmatpush.msra.mxu0 %v315
    %755 = vmatpush.msra.mxu0 %v314
    %756 = vmatpush.msra.mxu0 %v313
    %757 = vmatpush.msra.mxu0 %v312
    %758 = vmatpush.msra.mxu0 %v311
    %759 = vmatpush.msra.mxu0 %v310
    %760 = vmatpush.msra.mxu0 %v309
    %761 = vmatpush.msra.mxu0 %v308
    %762 = vmatpush.msra.mxu0 %v307
    %763 = vmatpush.msra.mxu0 %v306
    %764 = vmatpush.msra.mxu0 %v305
    %765 = vmatpush.msra.mxu0 %v304
    %766 = vmatpush.msra.mxu0 %v303
    %767 = vmatpush.msra.mxu0 %v302
    %768 = vmatpush.msra.mxu0 %v301
    %769 = vmatmul.f32.gmra.mxu0 %v37
    %v770 = vpop.f32.mrf.mxu0
    %v771 = vadd.f32 %v751, %v770
    %772 = vdwg.mxu0
    %773 = vmatpush.msra.mxu0 %v332
    %774 = vmatpush.msra.mxu0 %v331
    %775 = vmatpush.msra.mxu0 %v330
    %776 = vmatpush.msra.mxu0 %v329
    %777 = vmatpush.msra.mxu0 %v328
    %778 = vmatpush.msra.mxu0 %v327
    %779 = vmatpush.msra.mxu0 %v326
    %780 = vmatpush.msra.mxu0 %v325
    %781 = vmatpush.msra.mxu0 %v324
    %782 = vmatpush.msra.mxu0 %v323
    %783 = vmatpush.msra.mxu0 %v322
    %784 = vmatpush.msra.mxu0 %v321
    %785 = vmatpush.msra.mxu0 %v320
    %786 = vmatpush.msra.mxu0 %v319
    %787 = vmatpush.msra.mxu0 %v318
    %788 = vmatpush.msra.mxu0 %v317
    %789 = vmatmul.f32.gmra.mxu0 %v38
    %v790 = vpop.f32.mrf.mxu0
    %v791 = vadd.f32 %v771, %v790
    %792 = vdwg.mxu0
    %793 = vmatpush.msra.mxu0 %v348
    %794 = vmatpush.msra.mxu0 %v347
    %795 = vmatpush.msra.mxu0 %v346
    %796 = vmatpush.msra.mxu0 %v345
    %797 = vmatpush.msra.mxu0 %v344
    %798 = vmatpush.msra.mxu0 %v343
    %799 = vmatpush.msra.mxu0 %v342
    %800 = vmatpush.msra.mxu0 %v341
    %801 = vmatpush.msra.mxu0 %v340
    %802 = vmatpush.msra.mxu0 %v339
    %803 = vmatpush.msra.mxu0 %v338
    %804 = vmatpush.msra.mxu0 %v337
    %805 = vmatpush.msra.mxu0 %v336
    %806 = vmatpush.msra.mxu0 %v335
    %807 = vmatpush.msra.mxu0 %v334
    %808 = vmatpush.msra.mxu0 %v333
    %809 = vmatmul.f32.gmra.mxu0 %v39
    %v810 = vpop.f32.mrf.mxu0
    %v811 = vadd.f32 %v791, %v810
    %812 = vdwg.mxu0
    %813 = vmatpush.msra.mxu0 %v364
    %814 = vmatpush.msra.mxu0 %v363
    %815 = vmatpush.msra.mxu0 %v362
    %816 = vmatpush.msra.mxu0 %v361
    %817 = vmatpush.msra.mxu0 %v360
    %818 = vmatpush.msra.mxu0 %v359
    %819 = vmatpush.msra.mxu0 %v358
    %820 = vmatpush.msra.mxu0 %v357
    %821 = vmatpush.msra.mxu0 %v356
    %822 = vmatpush.msra.mxu0 %v355
    %823 = vmatpush.msra.mxu0 %v354
    %824 = vmatpush.msra.mxu0 %v353
    %825 = vmatpush.msra.mxu0 %v352
    %826 = vmatpush.msra.mxu0 %v351
    %827 = vmatpush.msra.mxu0 %v350
    %828 = vmatpush.msra.mxu0 %v349
    %829 = vmatmul.f32.gmra.mxu0 %v40
    %v830 = vpop.f32.mrf.mxu0
    %v831 = vadd.f32 %v811, %v830
    %832 = vdwg.mxu0
    %833 = vmatpush.msra.mxu0 %v380
    %834 = vmatpush.msra.mxu0 %v379
    %835 = vmatpush.msra.mxu0 %v378
    %836 = vmatpush.msra.mxu0 %v377
    %837 = vmatpush.msra.mxu0 %v376
    %838 = vmatpush.msra.mxu0 %v375
    %839 = vmatpush.msra.mxu0 %v374
    %840 = vmatpush.msra.mxu0 %v373
    %841 = vmatpush.msra.mxu0 %v372
    %842 = vmatpush.msra.mxu0 %v371
    %843 = vmatpush.msra.mxu0 %v370
    %844 = vmatpush.msra.mxu0 %v369
    %845 = vmatpush.msra.mxu0 %v368
    %846 = vmatpush.msra.mxu0 %v367
    %847 = vmatpush.msra.mxu0 %v366
    %848 = vmatpush.msra.mxu0 %v365
    %849 = vmatmul.f32.gmra.mxu0 %v41
    %v850 = vpop.f32.mrf.mxu0
    %v851 = vadd.f32 %v831, %v850
    %852 = vdwg.mxu0
    %853 = vmatpush.msra.mxu0 %v396
    %854 = vmatpush.msra.mxu0 %v395
    %855 = vmatpush.msra.mxu0 %v394
    %856 = vmatpush.msra.mxu0 %v393
    %857 = vmatpush.msra.mxu0 %v392
    %858 = vmatpush.msra.mxu0 %v391
    %859 = vmatpush.msra.mxu0 %v390
    %860 = vmatpush.msra.mxu0 %v389
    %861 = vmatpush.msra.mxu0 %v388
    %862 = vmatpush.msra.mxu0 %v387
    %863 = vmatpush.msra.mxu0 %v386
    %864 = vmatpush.msra.mxu0 %v385
    %865 = vmatpush.msra.mxu0 %v384
    %866 = vmatpush.msra.mxu0 %v383
    %867 = vmatpush.msra.mxu0 %v382
    %868 = vmatpush.msra.mxu0 %v381
    %869 = vmatmul.f32.gmra.mxu0 %v42
    %v870 = vpop.f32.mrf.mxu0
    %v871 = vadd.f32 %v851, %v870
    %872 = vdwg.mxu0
    %873 = vmatpush.msra.mxu0 %v412
    %874 = vmatpush.msra.mxu0 %v411
    %875 = vmatpush.msra.mxu0 %v410
    %876 = vmatpush.msra.mxu0 %v409
    %877 = vmatpush.msra.mxu0 %v408
    %878 = vmatpush.msra.mxu0 %v407
    %879 = vmatpush.msra.mxu0 %v406
    %880 = vmatpush.msra.mxu0 %v405
    %881 = vmatpush.msra.mxu0 %v404
    %882 = vmatpush.msra.mxu0 %v403
    %883 = vmatpush.msra.mxu0 %v402
    %884 = vmatpush.msra.mxu0 %v401
    %885 = vmatpush.msra.mxu0 %v400
    %886 = vmatpush.msra.mxu0 %v399
    %887 = vmatpush.msra.mxu0 %v398
    %888 = vmatpush.msra.mxu0 %v397
    %889 = vmatmul.f32.gmra.mxu0 %v43
    %v890 = vpop.f32.mrf.mxu0
    %v891 = vadd.f32 %v871, %v890
    %892 = vdwg.mxu0
    %893 = vmatpush.msra.mxu0 %v428
    %894 = vmatpush.msra.mxu0 %v427
    %895 = vmatpush.msra.mxu0 %v426
    %896 = vmatpush.msra.mxu0 %v425
    %897 = vmatpush.msra.mxu0 %v424
    %898 = vmatpush.msra.mxu0 %v423
    %899 = vmatpush.msra.mxu0 %v422
    %900 = vmatpush.msra.mxu0 %v421
    %901 = vmatpush.msra.mxu0 %v420
    %902 = vmatpush.msra.mxu0 %v419
    %903 = vmatpush.msra.mxu0 %v418
    %904 = vmatpush.msra.mxu0 %v417
    %905 = vmatpush.msra.mxu0 %v416
    %906 = vmatpush.msra.mxu0 %v415
    %907 = vmatpush.msra.mxu0 %v414
    %908 = vmatpush.msra.mxu0 %v413
    %909 = vmatmul.f32.gmra.mxu0 %v44
    %v910 = vpop.f32.mrf.mxu0
    %v911 = vadd.f32 %v891, %v910
    %912 = vdwg.mxu0
    %v913 = vmax.f32 %v911, 0.0
    %v914 = vld [vmem:[%s3] sm:$0xff]
    %v915 = vld [vmem:[%s3 + $0x8] sm:$0xff]
    %v916 = vld [vmem:[%s4] sm:$0x1]
    %v918 = vperm.slane %v916, 0
    %vm920 = vcmask 130048
    %v922 = vsel %vm920, %v913, 0
    %924 = vmatpush.msra.mxu0 0.0
    %925 = vmatpush.msra.mxu0 0.0
    %926 = vmatpush.msra.mxu0 0.0
    %927 = vmatpush.msra.mxu0 0.0
    %928 = vmatpush.msra.mxu0 0.0
    %929 = vmatpush.msra.mxu0 0.0
    %930 = vmatpush.msra.mxu0 0.0
    %931 = vmatpush.msra.mxu0 0.0
    %932 = vmatpush.msra.mxu0 0.0
    %933 = vmatpush.msra.mxu0 0.0
    %934 = vmatpush.msra.mxu0 0.0
    %935 = vmatpush.msra.mxu0 0.0
    %936 = vmatpush.msra.mxu0 0.0
    %937 = vmatpush.msra.mxu0 0.0
    %938 = vmatpush.msra.mxu0 %v915
    %939 = vmatpush.msra.mxu0 %v914
    %940 = vmatmul.f32.gmra.mxu0 %v922
    %v941 = vpop.f32.mrf.mxu0
    %v942 = vadd.f32 %v918, %v941
    %943 = vdwg.mxu0
    %944 = vst [vmem:[#allocation2] sm:$0xff] %v942
    // Predicated region
    $region22: #{dnn3_forward.1} parent=1 // pred_check
      _
    $region23: #{dnn3_forward.1} parent=1 // pred_check_branch
      %946 = sbr.rel (0) target = $region25
    $region24: #{dnn3_forward.1} parent=1 // pred_region
      %948 = vsyncadd [#allocation3], 0
      %s950 = sshll.u32 [#allocation2], 4
      %s951 = int_to_ptr.vmem [resolvable:$true] %s950
      %s952 = sshll.u32 %s5, 4
      %s953 = int_to_ptr.hbm [resolvable:$true] %s952
      %955 = dma.vmem_to_hbm [thread:$0]  %s951, 128, %s953, [#allocation3]
    $region25: #{dnn3_forward.1} parent=1 // pred_fallthru
      _
    // Predicated region
    $region26: #{dnn3_forward.1} parent=1 // pred_check
      _
    $region27: #{dnn3_forward.1} parent=1 // pred_check_branch
      %957 = sbr.rel (0) target = $region29
    $region28: #{dnn3_forward.1} parent=1 // pred_region
      %959 = dma.done [#allocation3], 128
    $region29: #{dnn3_forward.1} parent=1 // pred_fallthru
      _
    %960 = vsyncpa [#allocation3], 1

</llo_original>
